<compile_context>
chip_gen: v5e
topology: v5e:2x2
jax: 0.10.0
libtpu: 0.0.40
codegen_flags: <defaults>
</compile_context>

<pallas_src>
import jax
import jax.numpy as jnp
from jax.experimental import pallas as pl
from jax.experimental.pallas import tpu as pltpu


def _beta_fwd_kernel(x_ref, w_ref, b_ref, o_ref):
    # logits = x @ W + b (MXU, f32 accumulate), then numerically-stable softmax
    # over the last (lane) axis. Exact divide for the normalization (the approx
    # EUP reciprocal's ~2^-12 rel error is too coarse for a 1e-5 tolerance).
    x = x_ref[...]
    w = w_ref[...]
    logits = jnp.dot(x, w, preferred_element_type=jnp.float32) + b_ref[...]
    m = jnp.max(logits, axis=-1, keepdims=True)
    e = jnp.exp(logits - m)
    denom = jnp.sum(e, axis=-1, keepdims=True)
    o_ref[...] = (e / denom).astype(o_ref.dtype)


def _round_up(x, m):
    return ((x + m - 1) // m) * m


def _choose_batch_tile(B, block_b):
    """Largest reasonable batch tile (fewest grid steps), but >=2 balanced,
    8-row-aligned tiles once B is big enough that v7x's two TensorCores should
    both get work."""
    if B <= block_b:
        if B >= 1024:
            # Two balanced tiles for megacore; tb multiple of 8 keeps the block legal.
            return min(_round_up(pl.cdiv(B, 2), 8), B)
        return B  # single tile (tile == full dim is always legal)
    n_tiles = pl.cdiv(B, block_b)
    if n_tiles % 2:
        n_tiles += 1  # even tile count -> balanced split across 2 TCs
    return min(_round_up(pl.cdiv(B, n_tiles), 8), block_b)


def beta_forward(state, weight_t, bias, *, block_b=4096,
                 out_dtype=jnp.float32, compute_dtype=None):
    """state: [B, D], weight_t: [D, N], bias: [1, N] -> softmax(state @ W + b): [B, N].

    block_b: max rows per batch tile (sweepable; per-row streamed footprint is only
             (D + N) * itemsize, so large tiles fit VMEM everywhere).
    out_dtype: dtype of the stored output (bf16 cuts output HBM bytes in half).
    compute_dtype: optional cast of state/weight at the boundary (e.g. bf16 — the
             native MXU path on v6e/v7x); accumulation stays f32 either way.
    """
    B, D = state.shape
    D2, N = weight_t.shape
    assert D == D2 and bias.shape == (1, N)

    if compute_dtype is not None:
        state = state.astype(compute_dtype)
        weight_t = weight_t.astype(compute_dtype)
    bias = bias.astype(jnp.float32)  # added to f32 logits

    tb = _choose_batch_tile(B, block_b)
    grid = (pl.cdiv(B, tb),)

    # VMEM budget: double-buffered streamed x/o tiles + (nominally double-buffered
    # but DMA'd-once) resident weight/bias. Clamp to [32 MiB, 64 MiB]: safe on v5e
    # (16 MiB scoped default, 128 physical), v6e (32/128) and v7x (32/64 physical).
    in_b = jnp.dtype(state.dtype).itemsize
    w_b = jnp.dtype(weight_t.dtype).itemsize
    out_b = jnp.dtype(out_dtype).itemsize
    tile_bytes = 2 * tb * (D * in_b + N * out_b) + 2 * (D * N * w_b + N * 4)
    vmem_limit = int(min(max(2 * tile_bytes, 32 << 20), 64 << 20))

    return pl.pallas_call(
        _beta_fwd_kernel,
        out_shape=jax.ShapeDtypeStruct((B, N), out_dtype),
        grid_spec=pl.GridSpec(
            grid=grid,
            in_specs=[
                pl.BlockSpec((tb, D), lambda i: (i, 0)),   # streamed per batch tile
                pl.BlockSpec((D, N), lambda i: (0, 0)),    # weight: VMEM-resident
                pl.BlockSpec((1, N), lambda i: (0, 0)),    # bias:   VMEM-resident
            ],
            out_specs=pl.BlockSpec((tb, N), lambda i: (i, 0)),
        ),
        compiler_params=pltpu.CompilerParams(
            # Independent batch tiles: lets v7x shard the grid across its 2 TCs.
            dimension_semantics=("parallel",),
            vmem_limit_bytes=vmem_limit,
        ),
    )(state, weight_t, bias)


def _reference(state, weight_t, bias):
    logits = state @ weight_t + bias
    logits = logits - jnp.max(logits, axis=-1, keepdims=True)
    e = jnp.exp(logits)
    return e / jnp.sum(e, axis=-1, keepdims=True)


if __name__ == "__main__":
    # Small shapes consistent with Beta(input_size, num_items)
    B, input_size, num_items = 8, 32, 128

    key = jax.random.PRNGKey(0)
    k_state, k_action, k_w, k_b, k_big = jax.random.split(key, 5)

    # Deterministic synthetic parameters (matching nn.Linear(input_size, num_items)
    # shapes: weight [num_items, input_size], bias [num_items]); weight kept
    # pre-transposed for the kernel.
    bound = 1.0 / jnp.sqrt(jnp.float32(input_size))
    weight = jax.random.uniform(k_w, (num_items, input_size), jnp.float32, -bound, bound)
    bias = jax.random.uniform(k_b, (num_items,), jnp.float32, -bound, bound)
    weight_t = jnp.transpose(weight)                # [input_size, num_items]
    bias_row = bias.reshape(1, num_items)           # [1, num_items]

    state = jax.random.normal(k_state, (B, input_size), jnp.float32)
    # `action` only feeds the (skipped) training step; kept for interface parity.
    action = jax.nn.one_hot(
        jax.random.randint(k_action, (B,), 0, num_items), num_items
    ).astype(jnp.float32)

    out = beta_forward(state, weight_t, bias_row)
    out = jax.block_until_ready(out)

    ref = _reference(state, weight_t, bias_row)
    assert out.shape == (B, num_items)
    assert jnp.allclose(out, ref, atol=1e-5, rtol=1e-5)
    assert jnp.allclose(jnp.sum(out, axis=-1), 1.0, atol=1e-5)

    # Caller-side-batched path: many stacked per-step states in one call,
    # grid of 2 balanced 1024-row tiles (megacore-friendly), resident weight.
    B_big = 2048
    state_big = jax.random.normal(k_big, (B_big, input_size), jnp.float32)
    out_big = jax.block_until_ready(beta_forward(state_big, weight_t, bias_row))
    ref_big = _reference(state_big, weight_t, bias_row)
    assert out_big.shape == (B_big, num_items)
    assert jnp.allclose(out_big, ref_big, atol=1e-5, rtol=1e-5)
    assert jnp.allclose(jnp.sum(out_big, axis=-1), 1.0, atol=1e-5)

    # Optional reduced-precision I/O mode (bf16 in/out, f32 accumulate + softmax):
    # halves streamed-input bytes and output bytes on this HBM-bound shape.
    out_bf16 = jax.block_until_ready(
        beta_forward(state_big, weight_t, bias_row,
                     out_dtype=jnp.bfloat16, compute_dtype=jnp.bfloat16)
    )
    assert out_bf16.dtype == jnp.bfloat16
    assert jnp.allclose(out_bf16.astype(jnp.float32), ref_big, atol=2.5e-2)

    print("KERNEL_OK")
</pallas_src>

<mosaic_0001>
module attributes {stable_mosaic.version = 11 : i64} {
  func.func @_beta_fwd_kernel(%arg0: i32, %arg1: memref<8x32xf32, #tpu.memory_space<vmem>>, %arg2: memref<32x128xf32, #tpu.memory_space<vmem>>, %arg3: memref<1x128xf32, #tpu.memory_space<vmem>>, %arg4: memref<8x128xf32, #tpu.memory_space<vmem>>) attributes {dimension_semantics = [#tpu.dimension_semantics<parallel>], iteration_bounds = array<i64: 1>, scalar_prefetch = 0 : i64, scratch_operands = 0 : i64, tpu.core_type = #tpu.core_type<tc>, window_params = [{transform_indices = @transform_0, window_bounds = array<i64: 8, 32>}, {pipeline_mode = #tpu.pipeline_mode<synchronous>, transform_indices = @transform_1, window_bounds = array<i64: 32, 128>}, {pipeline_mode = #tpu.pipeline_mode<synchronous>, transform_indices = @transform_2, window_bounds = array<i64: 1, 128>}, {transform_indices = @transform_3, window_bounds = array<i64: 8, 128>}]} {
    %c0 = arith.constant 0 : index
    %c0_0 = arith.constant 0 : index
    %0 = vector.load %arg1[%c0, %c0_0] : memref<8x32xf32, #tpu.memory_space<vmem>>, vector<8x32xf32>
    %c0_1 = arith.constant 0 : index
    %c0_2 = arith.constant 0 : index
    %1 = vector.load %arg2[%c0_1, %c0_2] : memref<32x128xf32, #tpu.memory_space<vmem>>, vector<32x128xf32>
    %cst = arith.constant dense<0.000000e+00> : vector<8x128xf32>
    %2 = tpu.matmul %0, %1, %cst {dimension_numbers = #tpu.dot_dimension_numbers<[1], [0], [0], [1], [0, 0, 1, 1], [], []>} : vector<8x32xf32>, vector<32x128xf32>, vector<8x128xf32> -> vector<8x128xf32>
    %c0_3 = arith.constant 0 : index
    %c0_4 = arith.constant 0 : index
    %3 = vector.load %arg3[%c0_3, %c0_4] : memref<1x128xf32, #tpu.memory_space<vmem>>, vector<1x128xf32>
    %4 = vector.broadcast %3 : vector<1x128xf32> to vector<8x128xf32>
    %5 = arith.addf %2, %4 : vector<8x128xf32>
    %cst_5 = arith.constant dense<0xFF800000> : vector<8xf32>
    %6 = vector.multi_reduction <maximumf>, %5, %cst_5 [1] : vector<8x128xf32> to vector<8xf32>
    %7 = vector.shape_cast %6 : vector<8xf32> to vector<8x1xf32>
    %8 = vector.broadcast %7 : vector<8x1xf32> to vector<8x128xf32>
    %9 = arith.subf %5, %8 : vector<8x128xf32>
    %10 = math.exp %9 : vector<8x128xf32>
    %cst_6 = arith.constant dense<0.000000e+00> : vector<8xf32>
    %11 = vector.multi_reduction <add>, %10, %cst_6 [1] : vector<8x128xf32> to vector<8xf32>
    %12 = vector.shape_cast %11 : vector<8xf32> to vector<8x1xf32>
    %13 = vector.broadcast %12 : vector<8x1xf32> to vector<8x128xf32>
    %14 = arith.divf %10, %13 : vector<8x128xf32>
    %c0_7 = arith.constant 0 : index
    %c0_8 = arith.constant 0 : index
    %15 = vector.load %arg4[%c0_7, %c0_8] : memref<8x128xf32, #tpu.memory_space<vmem>>, vector<8x128xf32>
    tpu.vector_store %arg4[%c0_7, %c0_8], %14 {strides = array<i32>} : memref<8x128xf32, #tpu.memory_space<vmem>>, vector<8x128xf32>,
    return
  }
  func.func @transform_0(%arg0: i32) -> (i32, i32) {
    %c0_i32 = arith.constant 0 : i32
    %c0_i32_0 = arith.constant 0 : i32
    return %arg0, %c0_i32 : i32, i32
  }
  func.func @transform_1(%arg0: i32) -> (i32, i32) {
    %c0_i32 = arith.constant 0 : i32
    %c0_i32_0 = arith.constant 0 : i32
    %c0_i32_1 = arith.constant 0 : i32
    return %c0_i32, %c0_i32_0 : i32, i32
  }
  func.func @transform_2(%arg0: i32) -> (i32, i32) {
    %c0_i32 = arith.constant 0 : i32
    %c0_i32_0 = arith.constant 0 : i32
    %c0_i32_1 = arith.constant 0 : i32
    return %c0_i32, %c0_i32_0 : i32, i32
  }
  func.func @transform_3(%arg0: i32) -> (i32, i32) {
    %c0_i32 = arith.constant 0 : i32
    %c0_i32_0 = arith.constant 0 : i32
    return %arg0, %c0_i32 : i32, i32
  }
}

</mosaic_0001>

<llo_original>
// kernel: tpu_custom_call.1
$region0: #{tpu_custom_call.1}
  #allocation0 [shape = 'u32[]', space=smem, size = 0x4, offset = 0x4, fixed_abs, tag = 'smem constant byte address 0x4 - core index']
  #allocation1 [shape = 'u32[72,128]{1,0:T(1,128)}', space=vmem, size = 0x9000, scoped, tag = 'internal scratch']
  %s0 = inlined_call_operand.hbm [shape: f32[8,32], index: 0, kind: input, shape index: {}]
  %s1 = inlined_call_operand.hbm [shape: f32[32,128], index: 1, kind: input, shape index: {}]
  %s2 = inlined_call_operand.vmem [shape: f32[1,128], index: 2, kind: input, shape index: {}]
  %s3 = inlined_call_operand.hbm [shape: f32[8,128], index: 3, kind: output, shape index: {}]
  %s4 = sld [smem:[#allocation0]]
  $region30: #{tpu_custom_call.1} parent=0
    _
  %s6 = ssub.s32 1, %s4
  %s7 = scalar_select 0, %s6, %s4
  $region1: #{tpu_custom_call.1} parent=0
    #allocation2 [shape = 'u8[4096]{0}', space=vmem, size = 0x1000, scoped, tag = 'input window, operand 0, single buffered']
    #allocation3 [shape = 's32[1]{0}', space=sflag, size = 0x4, scoped, tag = 'scoped memory for tpu_custom_call.1']
    #allocation4 [shape = 's32[1]{0}', space=sflag, size = 0x4, scoped, tag = 'scoped memory for tpu_custom_call.1']
    #allocation5 [shape = 'u8[16384]{0}', space=vmem, size = 0x4000, scoped, tag = 'input window, operand 1, single buffered']
    #allocation6 [shape = 's32[1]{0}', space=sflag, size = 0x4, scoped, tag = 'scoped memory for tpu_custom_call.1']
    #allocation7 [shape = 'u8[4096]{0}', space=vmem, size = 0x1000, scoped, tag = 'output window, operand 0, single buffered']
    %8 = vsyncpa [#allocation3], 0
    %9 = vsyncpa [#allocation6], 0
    %10 = vsyncpa [#allocation4], 0
    // Predicated region
    $region2: #{tpu_custom_call.1} parent=1 // pred_check
      _
    $region3: #{tpu_custom_call.1} parent=1 // pred_check_branch
      %12 = sbr.rel (0) target = $region5
    $region4: #{tpu_custom_call.1} parent=1 // pred_region
      %14 = vsyncadd [#allocation3], 0
      %s16 = sshll.u32 %s0, 4
      %s17 = int_to_ptr.hbm [resolvable:$true] %s16
      %s18 = sshll.u32 [#allocation2], 4
      %s19 = int_to_ptr.vmem [resolvable:$true] %s18
      %21 = dma.hbm_to_vmem [thread:$0]  %s17, 128, %s19, [#allocation3]
    $region5: #{tpu_custom_call.1} parent=1 // pred_fallthru
      _
    // Predicated region
    $region6: #{tpu_custom_call.1} parent=1 // pred_check
      _
    $region7: #{tpu_custom_call.1} parent=1 // pred_check_branch
      %23 = sbr.rel (0) target = $region9
    $region8: #{tpu_custom_call.1} parent=1 // pred_region
      %25 = vsyncadd [#allocation6], 0
      %s26 = sshll.u32 %s1, 4
      %s27 = int_to_ptr.hbm [resolvable:$true] %s26
      %s28 = sshll.u32 [#allocation5], 4
      %s29 = int_to_ptr.vmem [resolvable:$true] %s28
      %34 = dma.hbm_to_vmem [thread:$0]  %s27, 512, %s29, [#allocation6], 128, 128, 8
    $region9: #{tpu_custom_call.1} parent=1 // pred_fallthru
      _
    // Predicated region
    $region10: #{tpu_custom_call.1} parent=1 // pred_check
      _
    $region11: #{tpu_custom_call.1} parent=1 // pred_check_branch
      %36 = sbr.rel (0) target = $region13
    $region12: #{tpu_custom_call.1} parent=1 // pred_region
      _
    $region13: #{tpu_custom_call.1} parent=1 // pred_fallthru
      _
    // Predicated region
    $region14: #{tpu_custom_call.1} parent=1 // pred_check
      _
    $region15: #{tpu_custom_call.1} parent=1 // pred_check_branch
      %38 = sbr.rel (0) target = $region17
    $region16: #{tpu_custom_call.1} parent=1 // pred_region
      %40 = dma.done [#allocation3], 128
    $region17: #{tpu_custom_call.1} parent=1 // pred_fallthru
      _
    // Predicated region
    $region18: #{tpu_custom_call.1} parent=1 // pred_check
      _
    $region19: #{tpu_custom_call.1} parent=1 // pred_check_branch
      %42 = sbr.rel (0) target = $region21
    $region20: #{tpu_custom_call.1} parent=1 // pred_region
      %44 = dma.done [#allocation6], 512
    $region21: #{tpu_custom_call.1} parent=1 // pred_fallthru
      _
    %v45 = vld [vmem:[#allocation2] sm:$0xff]
    %v46 = vld [vmem:[#allocation5] sm:$0xff]
    %v47 = vld [vmem:[#allocation5 + $0x8] sm:$0xff]
    %v48 = vld [vmem:[#allocation5 + $0x10] sm:$0xff]
    %v49 = vld [vmem:[#allocation5 + $0x18] sm:$0xff]
    %v50 = vld [vmem:[%s2] sm:$0x1]
    %v52 = vperm.slane %v50, 0
    %vm54 = vcmask 261120
    %v56 = vsel %vm54, %v45, 0
    %58 = vmatpush.msra.mxu0 0.0
    %59 = vmatpush.msra.mxu0 0.0
    %60 = vmatpush.msra.mxu0 0.0
    %61 = vmatpush.msra.mxu0 0.0
    %62 = vmatpush.msra.mxu0 0.0
    %63 = vmatpush.msra.mxu0 0.0
    %64 = vmatpush.msra.mxu0 0.0
    %65 = vmatpush.msra.mxu0 0.0
    %66 = vmatpush.msra.mxu0 0.0
    %67 = vmatpush.msra.mxu0 0.0
    %68 = vmatpush.msra.mxu0 0.0
    %69 = vmatpush.msra.mxu0 0.0
    %70 = vmatpush.msra.mxu0 %v49
    %71 = vmatpush.msra.mxu0 %v48
    %72 = vmatpush.msra.mxu0 %v47
    %73 = vmatpush.msra.mxu0 %v46
    %74 = vmatmul.f32.gmra.mxu0 %v56
    %v75 = vpop.f32.mrf.mxu0
    %v76 = vadd.f32 %v52, %v75
    %77 = vdwg.mxu0
    %78 = vmax.xlane.f32.xlu0 %v76
    %v79 = vpop.xlane.xlu0 %78
    %v80 = vsub.f32 %v76, %v79
    %v81 = vmul.f32 %v80, 1.442695
    %v82 = vpow.pop %v81
    %83 = vadd.xlane.f32.xlu0 %v82
    %v84 = vpop.xlane.xlu0 %83
    %v85 = vrcp.pop %v84
    %v86 = vmul.f32 %v84, %v85
    %v87 = vsub.f32 1.0, %v86
    %v88 = vmul.f32 %v85, %v87
    %v89 = vadd.f32 %v85, %v88
    %vm90 = vweird.f32 %v84
    %vm91 = vweird.f32 %v85
    %vm92 = vmor %vm90, %vm91
    %v93 = vsel %vm92, %v85, %v89
    %v94 = vand.u32 2147483647, %v84
    %vm95 = vcmp.eq.f32.partialorder %v94, 8.507059e+37
    %v96 = vand.u32 %v84, 2147483648
    %v97 = vor.u32 1.1754944e-38, %v96
    %v98 = vsel %vm95, %v97, %v93
    %v99 = vmul.f32 %v82, %v98
    %100 = vst [vmem:[#allocation7] sm:$0xff] %v99
    // Predicated region
    $region22: #{tpu_custom_call.1} parent=1 // pred_check
      _
    $region23: #{tpu_custom_call.1} parent=1 // pred_check_branch
      %102 = sbr.rel (0) target = $region25
    $region24: #{tpu_custom_call.1} parent=1 // pred_region
      %104 = vsyncadd [#allocation4], 0
      %s106 = sshll.u32 [#allocation7], 4
      %s107 = int_to_ptr.vmem [resolvable:$true] %s106
      %s108 = sshll.u32 %s3, 4
      %s109 = int_to_ptr.hbm [resolvable:$true] %s108
      %111 = dma.vmem_to_hbm [thread:$0]  %s107, 128, %s109, [#allocation4]
    $region25: #{tpu_custom_call.1} parent=1 // pred_fallthru
      _
    // Predicated region
    $region26: #{tpu_custom_call.1} parent=1 // pred_check
      _
    $region27: #{tpu_custom_call.1} parent=1 // pred_check_branch
      %113 = sbr.rel (0) target = $region29
    $region28: #{tpu_custom_call.1} parent=1 // pred_region
      %115 = dma.done [#allocation4], 128
    $region29: #{tpu_custom_call.1} parent=1 // pred_fallthru
      _
    %116 = vsyncpa [#allocation3], 1
    %117 = vsyncpa [#allocation6], 1
    %118 = vsyncpa [#allocation4], 1

</llo_original>
